<compile_context>
chip_gen: v6e
topology: v6e:2x2x1
jax: 0.10.0
libtpu: 0.0.40
codegen_flags: <defaults>
</compile_context>

<pallas_src>
import jax
import jax.numpy as jnp
import numpy as np
from jax.experimental import pallas as pl
from jax.experimental.pallas import tpu as pltpu


def add_pe_kernel(x_ref, pe_ref, o_ref):
    # (TB, TD, TL) + (TD, TL): the embedding broadcasts over the folded batch
    # dim in-register; pure VPU elementwise work, lane-dense stores.
    o_ref[...] = x_ref[...] + pe_ref[...]


def _aligned_tile(dim, align, cap):
    """Largest multiple of `align` <= min(dim, cap); full extent if dim <= align."""
    if dim <= align:
        return dim  # block dim == full array dim is always layout-legal
    t = (min(dim, cap) // align) * align
    return max(t, align)


def dynamic_positional_encoding(x, position_embedding, *, min_pallas_bytes=0):
    """x: (B, D, H, W); position_embedding: (1, D, H, W). Returns x + pe."""
    b, d, h, w = x.shape
    assert position_embedding.shape == (1, d, h, w)
    hw = h * w

    # Match PyTorch type promotion (e.g. bf16 activations + f32 params -> f32).
    out_dtype = jnp.result_type(x.dtype, position_embedding.dtype)
    dtype_bytes = jnp.dtype(out_dtype).itemsize

    # Tiny problems: custom-call launch + pipeline prologue dominate; let XLA fuse.
    if (b * d * hw + d * hw) * dtype_bytes < min_pallas_bytes:
        return x.astype(out_dtype) + position_embedding.astype(out_dtype)

    # Lane-dense views (contiguous reshapes are free).
    x3 = x.astype(out_dtype).reshape(b, d, hw)
    pe2 = position_embedding.astype(out_dtype).reshape(d, hw)

    # dtype-aware alignment: sublane 8 (f32) / 16 (bf16) / 32 (int8, fp8).
    sub_align = max(8, 32 // dtype_bytes)
    lane_align = 128

    # Caps keep each buffer <= ~2 MiB so the double-buffered working set fits
    # every generation's scoped VMEM (v5e 16 MiB default, v7x 32 MiB).
    tile_d = _aligned_tile(d, sub_align, 256)
    tile_l = _aligned_tile(hw, lane_align, 2048)

    # Fold as much batch as fits a ~2 MiB x-block budget; leftovers go to the
    # innermost grid axis (pe index_map ignores it -> pe DMA skipped there).
    row_bytes = tile_d * tile_l * dtype_bytes
    tile_b = max(1, min(b, (2 << 20) // max(row_bytes, 1)))

    grid = (pl.cdiv(d, tile_d), pl.cdiv(hw, tile_l), pl.cdiv(b, tile_b))

    x_block_bytes = tile_b * row_bytes
    pe_block_bytes = row_bytes
    working = 2 * (2 * x_block_bytes + pe_block_bytes)  # x, out, pe double-buffered
    vmem_limit = int(min(32 << 20, max(2 * working, 8 << 20)))

    out = pl.pallas_call(
        add_pe_kernel,
        out_shape=jax.ShapeDtypeStruct((b, d, hw), out_dtype),
        grid=grid,
        in_specs=[
            pl.BlockSpec((tile_b, tile_d, tile_l),
                         lambda di, li, bi: (bi, di, li)),
            # Embedding shared across batch: index_map ignores the batch axis,
            # so with batch innermost its DMA is not re-issued per batch step.
            pl.BlockSpec((tile_d, tile_l),
                         lambda di, li, bi: (di, li)),
        ],
        out_specs=pl.BlockSpec((tile_b, tile_d, tile_l),
                               lambda di, li, bi: (bi, di, li)),
        compiler_params=pltpu.CompilerParams(
            dimension_semantics=("parallel", "parallel", "arbitrary"),
            vmem_limit_bytes=vmem_limit),
    )(x3, pe2)

    return out.reshape(b, d, h, w)


def dynamic_positional_encoding_reference(x, position_embedding):
    return x + position_embedding


if __name__ == "__main__":
    key = jax.random.PRNGKey(0)

    def xavier_uniform(k, shape, dtype=jnp.float32):
        # nn.init.xavier_uniform_ on a (1, D, H, W) parameter:
        # fan_in = D*H*W, fan_out = 1*H*W, bound = sqrt(6 / (fan_in + fan_out)).
        _, d_model, hh, ww = shape
        fan_in = d_model * hh * ww
        fan_out = 1 * hh * ww
        bound = float(np.sqrt(6.0 / (fan_in + fan_out)))
        return jax.random.uniform(k, shape, dtype=dtype, minval=-bound, maxval=bound)

    # Test 1: aligned shape (D multiple of 8, H*W multiple of 128).
    B, D_MODEL, H, W = 2, 32, 16, 16
    kx, kp, key = jax.random.split(key, 3)
    x = jax.random.normal(kx, (B, D_MODEL, H, W), dtype=jnp.float32)
    pe = xavier_uniform(kp, (1, D_MODEL, H, W))
    out = jax.block_until_ready(
        dynamic_positional_encoding(x, pe, min_pallas_bytes=0))
    ref = dynamic_positional_encoding_reference(x, pe)
    np.testing.assert_allclose(np.asarray(out), np.asarray(ref),
                               rtol=1e-6, atol=1e-6)
    assert out.shape == (B, D_MODEL, H, W) and out.dtype == jnp.float32

    # Test 2: unaligned shape (D not multiple of 8, H*W < 128) to exercise
    # cdiv/ragged tiling and full-extent lane blocks.
    B2, D2, H2, W2 = 3, 12, 10, 10
    kx2, kp2, key = jax.random.split(key, 3)
    x2 = jax.random.normal(kx2, (B2, D2, H2, W2), dtype=jnp.float32)
    pe2 = xavier_uniform(kp2, (1, D2, H2, W2))
    out2 = jax.block_until_ready(
        dynamic_positional_encoding(x2, pe2, min_pallas_bytes=0))
    ref2 = dynamic_positional_encoding_reference(x2, pe2)
    np.testing.assert_allclose(np.asarray(out2), np.asarray(ref2),
                               rtol=1e-6, atol=1e-6)
    assert out2.shape == (B2, D2, H2, W2)

    print("KERNEL_OK")
</pallas_src>

<mosaic_0001>
module attributes {stable_mosaic.version = 11 : i64} {
  func.func @add_pe_kernel(%arg0: i32, %arg1: i32, %arg2: i32, %arg3: memref<2x32x256xf32, #tpu.memory_space<vmem>>, %arg4: memref<32x256xf32, #tpu.memory_space<vmem>>, %arg5: memref<2x32x256xf32, #tpu.memory_space<vmem>>) attributes {dimension_semantics = [#tpu.dimension_semantics<parallel>, #tpu.dimension_semantics<parallel>, #tpu.dimension_semantics<arbitrary>], iteration_bounds = array<i64: 1, 1, 1>, scalar_prefetch = 0 : i64, scratch_operands = 0 : i64, tpu.core_type = #tpu.core_type<tc>, window_params = [{transform_indices = @transform_0, window_bounds = array<i64: 2, 32, 256>}, {transform_indices = @transform_1, window_bounds = array<i64: 32, 256>}, {transform_indices = @transform_2, window_bounds = array<i64: 2, 32, 256>}]} {
    %c0 = arith.constant 0 : index
    %c0_0 = arith.constant 0 : index
    %c0_1 = arith.constant 0 : index
    %0 = vector.load %arg3[%c0, %c0_0, %c0_1] : memref<2x32x256xf32, #tpu.memory_space<vmem>>, vector<2x32x256xf32>
    %c0_2 = arith.constant 0 : index
    %c0_3 = arith.constant 0 : index
    %1 = vector.load %arg4[%c0_2, %c0_3] : memref<32x256xf32, #tpu.memory_space<vmem>>, vector<32x256xf32>
    %2 = vector.shape_cast %1 : vector<32x256xf32> to vector<1x32x256xf32>
    %3 = vector.broadcast %2 : vector<1x32x256xf32> to vector<2x32x256xf32>
    %4 = arith.addf %0, %3 : vector<2x32x256xf32>
    %c0_4 = arith.constant 0 : index
    %c0_5 = arith.constant 0 : index
    %c0_6 = arith.constant 0 : index
    %5 = vector.load %arg5[%c0_4, %c0_5, %c0_6] : memref<2x32x256xf32, #tpu.memory_space<vmem>>, vector<2x32x256xf32>
    tpu.vector_store %arg5[%c0_4, %c0_5, %c0_6], %4 {strides = array<i32>} : memref<2x32x256xf32, #tpu.memory_space<vmem>>, vector<2x32x256xf32>,
    return
  }
  func.func @transform_0(%arg0: i32, %arg1: i32, %arg2: i32) -> (i32, i32, i32) {
    %c0_i32 = arith.constant 0 : i32
    return %arg2, %arg0, %arg1 : i32, i32, i32
  }
  func.func @transform_1(%arg0: i32, %arg1: i32, %arg2: i32) -> (i32, i32) {
    %c0_i32 = arith.constant 0 : i32
    return %arg0, %arg1 : i32, i32
  }
  func.func @transform_2(%arg0: i32, %arg1: i32, %arg2: i32) -> (i32, i32, i32) {
    %c0_i32 = arith.constant 0 : i32
    return %arg2, %arg0, %arg1 : i32, i32, i32
  }
}

</mosaic_0001>

<llo_original>
// kernel: tpu_custom_call.1
$region0: #{tpu_custom_call.1}
  #allocation0 [shape = 'u32[]', space=smem, size = 0x4, offset = 0x4, fixed_abs, tag = 'smem constant byte address 0x4 - core index']
  #allocation1 [shape = 'u32[144,128]{1,0:T(1,128)}', space=vmem, size = 0x12000, scoped, tag = 'internal scratch']
  %s0 = inlined_call_operand.hbm [shape: f32[2,32,256], index: 0, kind: input, shape index: {}]
  %s1 = inlined_call_operand.hbm [shape: f32[32,256], index: 1, kind: input, shape index: {}]
  %s2 = inlined_call_operand.hbm [shape: f32[2,32,256], index: 2, kind: output, shape index: {}]
  %s3 = sld [smem:[#allocation0]]
  $region26: #{tpu_custom_call.1} parent=0
    _
  %s5 = ssub.s32 1, %s3
  %s6 = scalar_select 0, %s5, %s3
  $region1: #{tpu_custom_call.1} parent=0
    #allocation2 [shape = 'u8[65536]{0}', space=vmem, size = 0x10000, scoped, tag = 'input window, operand 0, single buffered']
    #allocation3 [shape = 's32[1]{0}', space=sflag, size = 0x4, scoped, tag = 'scoped memory for tpu_custom_call.1']
    #allocation4 [shape = 's32[1]{0}', space=sflag, size = 0x4, scoped, tag = 'scoped memory for tpu_custom_call.1']
    #allocation5 [shape = 'u8[32768]{0}', space=vmem, size = 0x8000, scoped, tag = 'input window, operand 1, single buffered']
    #allocation6 [shape = 's32[1]{0}', space=sflag, size = 0x4, scoped, tag = 'scoped memory for tpu_custom_call.1']
    #allocation7 [shape = 'u8[65536]{0}', space=vmem, size = 0x10000, scoped, tag = 'output window, operand 0, single buffered']
    %7 = vsyncpa [#allocation3], 0
    %8 = vsyncpa [#allocation6], 0
    %9 = vsyncpa [#allocation4], 0
    // Predicated region
    $region2: #{tpu_custom_call.1} parent=1 // pred_check
      _
    $region3: #{tpu_custom_call.1} parent=1 // pred_check_branch
      %11 = sbr.rel (0) target = $region5
    $region4: #{tpu_custom_call.1} parent=1 // pred_region
      %s13 = ssub.s32 2048, 2048
      %14 = vsyncadd [#allocation3], %s13
      %s15 = sshll.u32 [#allocation2], 4
      %s16 = int_to_ptr.vmem [resolvable:$true] %s15
      %21 = dma.hbm_to_vmem [thread:$0]  %s0, 2048, %s16, [#allocation3], 256, 256, 16
    $region5: #{tpu_custom_call.1} parent=1 // pred_fallthru
      _
    // Predicated region
    $region6: #{tpu_custom_call.1} parent=1 // pred_check
      _
    $region7: #{tpu_custom_call.1} parent=1 // pred_check_branch
      %23 = sbr.rel (0) target = $region9
    $region8: #{tpu_custom_call.1} parent=1 // pred_region
      %s25 = ssub.s32 1024, 1024
      %26 = vsyncadd [#allocation6], %s25
      %s27 = sshll.u32 [#allocation5], 4
      %s28 = int_to_ptr.vmem [resolvable:$true] %s27
      %33 = dma.hbm_to_vmem [thread:$0]  %s1, 1024, %s28, [#allocation6], 256, 256, 16
    $region9: #{tpu_custom_call.1} parent=1 // pred_fallthru
      _
    // Predicated region
    $region10: #{tpu_custom_call.1} parent=1 // pred_check
      _
    $region11: #{tpu_custom_call.1} parent=1 // pred_check_branch
      %35 = sbr.rel (0) target = $region13
    $region12: #{tpu_custom_call.1} parent=1 // pred_region
      %36 = dma.done [#allocation3], 2048
    $region13: #{tpu_custom_call.1} parent=1 // pred_fallthru
      _
    // Predicated region
    $region14: #{tpu_custom_call.1} parent=1 // pred_check
      _
    $region15: #{tpu_custom_call.1} parent=1 // pred_check_branch
      %38 = sbr.rel (0) target = $region17
    $region16: #{tpu_custom_call.1} parent=1 // pred_region
      %39 = dma.done [#allocation6], 1024
    $region17: #{tpu_custom_call.1} parent=1 // pred_fallthru
      _
    %v40 = vld [vmem:[#allocation2] sm:$0xff]
    %v41 = vld [vmem:[#allocation2 + $0x8] sm:$0xff]
    %v42 = vld [vmem:[#allocation2 + $0x10] sm:$0xff]
    %v43 = vld [vmem:[#allocation2 + $0x18] sm:$0xff]
    %v44 = vld [vmem:[#allocation2 + $0x20] sm:$0xff]
    %v45 = vld [vmem:[#allocation2 + $0x28] sm:$0xff]
    %v46 = vld [vmem:[#allocation2 + $0x30] sm:$0xff]
    %v47 = vld [vmem:[#allocation2 + $0x38] sm:$0xff]
    %v48 = vld [vmem:[#allocation2 + $0x40] sm:$0xff]
    %v49 = vld [vmem:[#allocation2 + $0x48] sm:$0xff]
    %v50 = vld [vmem:[#allocation2 + $0x50] sm:$0xff]
    %v51 = vld [vmem:[#allocation2 + $0x58] sm:$0xff]
    %v52 = vld [vmem:[#allocation2 + $0x60] sm:$0xff]
    %v53 = vld [vmem:[#allocation2 + $0x68] sm:$0xff]
    %v54 = vld [vmem:[#allocation2 + $0x70] sm:$0xff]
    %v55 = vld [vmem:[#allocation2 + $0x78] sm:$0xff]
    %v56 = vld [vmem:[#allocation5] sm:$0xff]
    %v57 = vld [vmem:[#allocation5 + $0x8] sm:$0xff]
    %v58 = vld [vmem:[#allocation5 + $0x10] sm:$0xff]
    %v59 = vld [vmem:[#allocation5 + $0x18] sm:$0xff]
    %v60 = vld [vmem:[#allocation5 + $0x20] sm:$0xff]
    %v61 = vld [vmem:[#allocation5 + $0x28] sm:$0xff]
    %v62 = vld [vmem:[#allocation5 + $0x30] sm:$0xff]
    %v63 = vld [vmem:[#allocation5 + $0x38] sm:$0xff]
    %v64 = vadd.f32 %v40, %v56
    %v65 = vadd.f32 %v41, %v57
    %v66 = vadd.f32 %v42, %v58
    %v67 = vadd.f32 %v43, %v59
    %v68 = vadd.f32 %v44, %v60
    %v69 = vadd.f32 %v45, %v61
    %v70 = vadd.f32 %v46, %v62
    %v71 = vadd.f32 %v47, %v63
    %v72 = vadd.f32 %v48, %v56
    %v73 = vadd.f32 %v49, %v57
    %v74 = vadd.f32 %v50, %v58
    %v75 = vadd.f32 %v51, %v59
    %v76 = vadd.f32 %v52, %v60
    %v77 = vadd.f32 %v53, %v61
    %v78 = vadd.f32 %v54, %v62
    %v79 = vadd.f32 %v55, %v63
    %80 = vst [vmem:[#allocation7] sm:$0xff] %v64
    %81 = vst [vmem:[#allocation7 + $0x8] sm:$0xff] %v65
    %82 = vst [vmem:[#allocation7 + $0x10] sm:$0xff] %v66
    %83 = vst [vmem:[#allocation7 + $0x18] sm:$0xff] %v67
    %84 = vst [vmem:[#allocation7 + $0x20] sm:$0xff] %v68
    %85 = vst [vmem:[#allocation7 + $0x28] sm:$0xff] %v69
    %86 = vst [vmem:[#allocation7 + $0x30] sm:$0xff] %v70
    %87 = vst [vmem:[#allocation7 + $0x38] sm:$0xff] %v71
    %88 = vst [vmem:[#allocation7 + $0x40] sm:$0xff] %v72
    %89 = vst [vmem:[#allocation7 + $0x48] sm:$0xff] %v73
    %90 = vst [vmem:[#allocation7 + $0x50] sm:$0xff] %v74
    %91 = vst [vmem:[#allocation7 + $0x58] sm:$0xff] %v75
    %92 = vst [vmem:[#allocation7 + $0x60] sm:$0xff] %v76
    %93 = vst [vmem:[#allocation7 + $0x68] sm:$0xff] %v77
    %94 = vst [vmem:[#allocation7 + $0x70] sm:$0xff] %v78
    %95 = vst [vmem:[#allocation7 + $0x78] sm:$0xff] %v79
    // Predicated region
    $region18: #{tpu_custom_call.1} parent=1 // pred_check
      _
    $region19: #{tpu_custom_call.1} parent=1 // pred_check_branch
      %97 = sbr.rel (0) target = $region21
    $region20: #{tpu_custom_call.1} parent=1 // pred_region
      %s99 = ssub.s32 2048, 2048
      %100 = vsyncadd [#allocation4], %s99
      %s101 = sshll.u32 [#allocation7], 4
      %s102 = int_to_ptr.vmem [resolvable:$true] %s101
      %107 = dma.vmem_to_hbm [thread:$0]  %s102, 2048, %s2, [#allocation4], 256, 256, 16
    $region21: #{tpu_custom_call.1} parent=1 // pred_fallthru
      _
    // Predicated region
    $region22: #{tpu_custom_call.1} parent=1 // pred_check
      _
    $region23: #{tpu_custom_call.1} parent=1 // pred_check_branch
      %109 = sbr.rel (0) target = $region25
    $region24: #{tpu_custom_call.1} parent=1 // pred_region
      %110 = dma.done [#allocation4], 2048
    $region25: #{tpu_custom_call.1} parent=1 // pred_fallthru
      _
    %111 = vsyncpa [#allocation3], 1
    %112 = vsyncpa [#allocation6], 1
    %113 = vsyncpa [#allocation4], 1

</llo_original>
